<compile_context>
chip_gen: v6e
topology: v6e:2x2x1
jax: 0.10.0
libtpu: 0.0.40
codegen_flags: <defaults>
</compile_context>

<pallas_src>
import jax
import jax.numpy as jnp
from jax import lax
from jax.experimental import pallas as pl
from jax.experimental.pallas import tpu as pltpu


def _round_up(x: int, m: int) -> int:
    return ((x + m - 1) // m) * m


def _cdiv(a: int, b: int) -> int:
    return (a + b - 1) // b


def _sublane_multiple(itemsize: int) -> int:
    # Packed rows per sublane group: f32 -> 8, bf16/f16 -> 16, int8/fp8 -> 32.
    return max(8, 32 // max(1, itemsize))


def _choose_tile_b(batch: int, hidden: int, itemsize: int) -> int:
    """Row tile sized against REAL VMEM use (inputs double-buffered in their
    HBM dtype + ~4 live f32 temporaries per element), capped at 512 rows and
    forced to give several pipeline steps when the batch allows."""
    sub = _sublane_multiple(itemsize)
    per_row_bytes = hidden * (4 * itemsize + 4 * 4)   # 2 in * 2 bufs + f32 temps
    budget_bytes = 20 * 1024 * 1024                   # headroom under 32 MiB scoped
    max_rows = max(sub, (budget_bytes // per_row_bytes) // sub * sub)
    max_rows = min(max_rows, 512)                     # diminishing returns past this
    # Aim for >= ~4 grid steps: DMA/compute overlap + dual-TC split on v7x.
    steps_cap = _round_up(_cdiv(batch, 4), sub)
    return min(max_rows, steps_cap, _round_up(batch, sub))


def _make_distill_kernel(tile_b: int, true_batch: int, ragged: bool):
    def kernel(s_ref, t_ref, o_ref):
        # (tile_b, H) tile of each input; upcast narrow dtypes to f32 in-kernel
        # so HBM traffic stays in the narrow dtype.
        s = s_ref[...].astype(jnp.float32)
        t = t_ref[...].astype(jnp.float32)
        hidden = s.shape[1]

        # Hidden-axis reductions as MXU matvecs (ones column): the MXU is idle
        # in this kernel, so the 3 reduce-adds + cross-lane reduce are free.
        ones_col = jnp.ones((hidden, 1), dtype=jnp.float32)
        ss = jnp.dot(s * s, ones_col, preferred_element_type=jnp.float32)
        tt = jnp.dot(t * t, ones_col, preferred_element_type=jnp.float32)

        # 1 / max(||x||, eps) == rsqrt(max(||x||^2, eps^2))  (EUP, not VALU)
        eps2 = jnp.float32(1e-24)   # (F.normalize default eps = 1e-12) squared
        inv_s = lax.rsqrt(jnp.maximum(ss, eps2))
        inv_t = lax.rsqrt(jnp.maximum(tt, eps2))

        # Direct difference of the normalized rows: numerically stable when
        # student ~= teacher (no O(1)-term cancellation).
        diff = s * inv_s - t * inv_t
        row = jnp.dot(diff * diff, ones_col, preferred_element_type=jnp.float32)

        if ragged:
            # Last tile reads past the true batch: the OOB rows hold
            # unspecified VMEM data, so force their partials to exactly 0
            # (jnp.where select -> NaN/Inf garbage cannot leak into the sum).
            base = pl.program_id(0) * tile_b
            rid = lax.broadcasted_iota(jnp.int32, (tile_b, 1), 0) + base
            row = jnp.where(rid < true_batch, row, jnp.float32(0.0))

        o_ref[...] = row

    return kernel


class DistillationLoss:
    """Pallas TPU implementation of the PyTorch DistillationLoss module."""

    def __init__(self, temperature: float = 2.0):
        # Unused in forward (parity with the PyTorch reference).
        self.temperature = temperature

    def __call__(self, student_embeddings, teacher_embeddings):
        assert student_embeddings.shape == teacher_embeddings.shape, (
            student_embeddings.shape, teacher_embeddings.shape)
        batch, hidden = student_embeddings.shape

        s_item = jnp.dtype(student_embeddings.dtype).itemsize
        t_item = jnp.dtype(teacher_embeddings.dtype).itemsize
        itemsize = max(s_item, t_item)

        tile_b = _choose_tile_b(batch, hidden, itemsize)
        grid = _cdiv(batch, tile_b)
        ragged = (grid * tile_b != batch)

        # TODO(synk): if production hidden < 128, reshape so the lane axis is
        # a multiple of 128 to avoid padded vregs/DMA beats (irrelevant here).

        kernel = _make_distill_kernel(tile_b, batch, ragged)

        cost = pl.CostEstimate(
            flops=12 * batch * hidden,
            transcendentals=2 * batch,
            bytes_accessed=batch * hidden * (s_item + t_item) + grid * tile_b * 4,
        )

        partial = pl.pallas_call(
            kernel,
            out_shape=jax.ShapeDtypeStruct((grid * tile_b, 1), jnp.float32),
            grid_spec=pltpu.PrefetchScalarGridSpec(
                num_scalar_prefetch=0,
                grid=(grid,),
                in_specs=[
                    pl.BlockSpec((tile_b, hidden), lambda i: (i, 0)),
                    pl.BlockSpec((tile_b, hidden), lambda i: (i, 0)),
                ],
                out_specs=pl.BlockSpec((tile_b, 1), lambda i: (i, 0)),
            ),
            compiler_params=pltpu.CompilerParams(
                dimension_semantics=("parallel",),
                vmem_limit_bytes=32 * 1024 * 1024,   # safe on v5e/v6e/v7x
            ),
            cost_estimate=cost,
        )(student_embeddings, teacher_embeddings)

        # Tiny final reduction (grid*tile_b floats); masked / out-of-range rows
        # contributed exactly 0, so divide by the TRUE element count.
        return jnp.sum(partial) / jnp.float32(batch * hidden)


def _reference(student, teacher):
    eps = 1e-12
    s = student.astype(jnp.float32)
    t = teacher.astype(jnp.float32)
    s = s / jnp.maximum(jnp.linalg.norm(s, axis=1, keepdims=True), eps)
    t = t / jnp.maximum(jnp.linalg.norm(t, axis=1, keepdims=True), eps)
    return jnp.mean((s - t) ** 2)


if __name__ == "__main__":
    key = jax.random.PRNGKey(0)
    ks = jax.random.split(key, 8)
    loss_fn = DistillationLoss(temperature=2.0)

    # 1) Small f32, tile divides batch exactly (grid=1).
    s1 = jax.random.normal(ks[0], (8, 32), dtype=jnp.float32)
    t1 = jax.random.normal(ks[1], (8, 32), dtype=jnp.float32)
    out1 = loss_fn(s1, t1)
    jax.block_until_ready(out1)
    ref1 = _reference(s1, t1)
    assert jnp.allclose(out1, ref1, atol=1e-5, rtol=1e-5), (out1, ref1)

    # 2) Ragged bf16 batch (in-kernel mask path, no jnp.pad copy).
    s2 = jax.random.normal(ks[2], (10, 32), jnp.float32).astype(jnp.bfloat16)
    t2 = jax.random.normal(ks[3], (10, 32), jnp.float32).astype(jnp.bfloat16)
    out2 = loss_fn(s2, t2)
    jax.block_until_ready(out2)
    ref2 = _reference(s2, t2)
    assert jnp.allclose(out2, ref2, atol=1e-5, rtol=1e-5), (out2, ref2)

    # 3) Multi-step grid with a ragged last tile (pipeline + mask together).
    s3 = jax.random.normal(ks[4], (300, 256), dtype=jnp.float32)
    t3 = jax.random.normal(ks[5], (300, 256), dtype=jnp.float32)
    out3 = loss_fn(s3, t3)
    jax.block_until_ready(out3)
    ref3 = _reference(s3, t3)
    assert jnp.allclose(out3, ref3, atol=1e-5, rtol=1e-5), (out3, ref3)

    # 4) Near-identical inputs (late-training regime) — validates the
    #    numerically-stable direct-difference form.
    s4 = jax.random.normal(ks[6], (64, 128), dtype=jnp.float32)
    t4 = s4 + 1e-3 * jax.random.normal(ks[7], (64, 128), dtype=jnp.float32)
    out4 = loss_fn(s4, t4)
    jax.block_until_ready(out4)
    ref4 = _reference(s4, t4)
    assert jnp.allclose(out4, ref4, rtol=5e-3, atol=1e-12), (out4, ref4)

    print("KERNEL_OK")
</pallas_src>

<mosaic_0001>
module attributes {stable_mosaic.version = 11 : i64} {
  func.func @kernel(%arg0: i32, %arg1: memref<8x32xf32, #tpu.memory_space<vmem>>, %arg2: memref<8x32xf32, #tpu.memory_space<vmem>>, %arg3: memref<8x1xf32, #tpu.memory_space<vmem>>) attributes {dimension_semantics = [#tpu.dimension_semantics<parallel>], iteration_bounds = array<i64: 1>, scalar_prefetch = 0 : i64, scratch_operands = 0 : i64, tpu.core_type = #tpu.core_type<tc>, window_params = [{transform_indices = @transform_0, window_bounds = array<i64: 8, 32>}, {transform_indices = @transform_1, window_bounds = array<i64: 8, 32>}, {transform_indices = @transform_2, window_bounds = array<i64: 8, 1>}]} {
    %c0 = arith.constant 0 : index
    %c0_0 = arith.constant 0 : index
    %0 = vector.load %arg1[%c0, %c0_0] : memref<8x32xf32, #tpu.memory_space<vmem>>, vector<8x32xf32>
    %c0_1 = arith.constant 0 : index
    %c0_2 = arith.constant 0 : index
    %1 = vector.load %arg2[%c0_1, %c0_2] : memref<8x32xf32, #tpu.memory_space<vmem>>, vector<8x32xf32>
    %cst = arith.constant 1.000000e+00 : f32
    %2 = vector.broadcast %cst : f32 to vector<32x1xf32>
    %3 = arith.mulf %0, %0 : vector<8x32xf32>
    %cst_3 = arith.constant dense<0.000000e+00> : vector<8x1xf32>
    %4 = tpu.matmul %3, %2, %cst_3 {dimension_numbers = #tpu.dot_dimension_numbers<[1], [0], [0], [1], [0, 0, 1, 1], [], []>} : vector<8x32xf32>, vector<32x1xf32>, vector<8x1xf32> -> vector<8x1xf32>
    %5 = arith.mulf %1, %1 : vector<8x32xf32>
    %cst_4 = arith.constant dense<0.000000e+00> : vector<8x1xf32>
    %6 = tpu.matmul %5, %2, %cst_4 {dimension_numbers = #tpu.dot_dimension_numbers<[1], [0], [0], [1], [0, 0, 1, 1], [], []>} : vector<8x32xf32>, vector<32x1xf32>, vector<8x1xf32> -> vector<8x1xf32>
    %cst_5 = arith.constant 1.000000e-24 : f32
    %7 = vector.broadcast %cst_5 : f32 to vector<8x1xf32>
    %8 = arith.maximumf %4, %7 : vector<8x1xf32>
    %9 = math.rsqrt %8 : vector<8x1xf32>
    %cst_6 = arith.constant 1.000000e-24 : f32
    %10 = vector.broadcast %cst_6 : f32 to vector<8x1xf32>
    %11 = arith.maximumf %6, %10 : vector<8x1xf32>
    %12 = math.rsqrt %11 : vector<8x1xf32>
    %13 = vector.broadcast %9 : vector<8x1xf32> to vector<8x32xf32>
    %14 = arith.mulf %0, %13 : vector<8x32xf32>
    %15 = vector.broadcast %12 : vector<8x1xf32> to vector<8x32xf32>
    %16 = arith.mulf %1, %15 : vector<8x32xf32>
    %17 = arith.subf %14, %16 : vector<8x32xf32>
    %18 = arith.mulf %17, %17 : vector<8x32xf32>
    %cst_7 = arith.constant dense<0.000000e+00> : vector<8x1xf32>
    %19 = tpu.matmul %18, %2, %cst_7 {dimension_numbers = #tpu.dot_dimension_numbers<[1], [0], [0], [1], [0, 0, 1, 1], [], []>} : vector<8x32xf32>, vector<32x1xf32>, vector<8x1xf32> -> vector<8x1xf32>
    %c0_8 = arith.constant 0 : index
    %c0_9 = arith.constant 0 : index
    %20 = vector.load %arg3[%c0_8, %c0_9] : memref<8x1xf32, #tpu.memory_space<vmem>>, vector<8x1xf32>
    tpu.vector_store %arg3[%c0_8, %c0_9], %19 {strides = array<i32>} : memref<8x1xf32, #tpu.memory_space<vmem>>, vector<8x1xf32>,
    return
  }
  func.func @transform_0(%arg0: i32) -> (i32, i32) {
    %c0_i32 = arith.constant 0 : i32
    %c0_i32_0 = arith.constant 0 : i32
    return %arg0, %c0_i32 : i32, i32
  }
  func.func @transform_1(%arg0: i32) -> (i32, i32) {
    %c0_i32 = arith.constant 0 : i32
    %c0_i32_0 = arith.constant 0 : i32
    return %arg0, %c0_i32 : i32, i32
  }
  func.func @transform_2(%arg0: i32) -> (i32, i32) {
    %c0_i32 = arith.constant 0 : i32
    %c0_i32_0 = arith.constant 0 : i32
    return %arg0, %c0_i32 : i32, i32
  }
}

</mosaic_0001>

<llo_original>
// kernel: tpu_custom_call.1
$region0: #{tpu_custom_call.1}
  #allocation0 [shape = 'u32[]', space=smem, size = 0x4, offset = 0x4, fixed_abs, tag = 'smem constant byte address 0x4 - core index']
  #allocation1 [shape = 'u32[144,128]{1,0:T(1,128)}', space=vmem, size = 0x12000, scoped, tag = 'internal scratch']
  %s0 = inlined_call_operand.hbm [shape: f32[8,32], index: 0, kind: input, shape index: {}]
  %s1 = inlined_call_operand.hbm [shape: f32[8,32], index: 1, kind: input, shape index: {}]
  %s2 = inlined_call_operand.vmem [shape: f32[8,1], index: 2, kind: output, shape index: {}]
  %s3 = sld [smem:[#allocation0]]
  $region26: #{tpu_custom_call.1} parent=0
    _
  %s5 = ssub.s32 1, %s3
  %s6 = scalar_select 0, %s5, %s3
  $region1: #{tpu_custom_call.1} parent=0
    #allocation2 [shape = 'u8[4096]{0}', space=vmem, size = 0x1000, scoped, tag = 'input window, operand 0, single buffered']
    #allocation3 [shape = 's32[1]{0}', space=sflag, size = 0x4, scoped, tag = 'scoped memory for tpu_custom_call.1']
    #allocation4 [shape = 'u8[4096]{0}', space=vmem, size = 0x1000, scoped, tag = 'input window, operand 1, single buffered']
    #allocation5 [shape = 's32[1]{0}', space=sflag, size = 0x4, scoped, tag = 'scoped memory for tpu_custom_call.1']
    %7 = vsyncpa [#allocation3], 0
    %8 = vsyncpa [#allocation5], 0
    // Predicated region
    $region2: #{tpu_custom_call.1} parent=1 // pred_check
      _
    $region3: #{tpu_custom_call.1} parent=1 // pred_check_branch
      %10 = sbr.rel (0) target = $region5
    $region4: #{tpu_custom_call.1} parent=1 // pred_region
      %s12 = ssub.s32 128, 128
      %13 = vsyncadd [#allocation3], %s12
      %s15 = sshll.u32 [#allocation2], 4
      %s16 = int_to_ptr.vmem [resolvable:$true] %s15
      %18 = dma.hbm_to_vmem [thread:$0]  %s0, 128, %s16, [#allocation3]
    $region5: #{tpu_custom_call.1} parent=1 // pred_fallthru
      _
    // Predicated region
    $region6: #{tpu_custom_call.1} parent=1 // pred_check
      _
    $region7: #{tpu_custom_call.1} parent=1 // pred_check_branch
      %20 = sbr.rel (0) target = $region9
    $region8: #{tpu_custom_call.1} parent=1 // pred_region
      %s22 = ssub.s32 128, 128
      %23 = vsyncadd [#allocation5], %s22
      %s25 = sshll.u32 [#allocation4], 4
      %s26 = int_to_ptr.vmem [resolvable:$true] %s25
      %28 = dma.hbm_to_vmem [thread:$0]  %s1, 128, %s26, [#allocation5]
    $region9: #{tpu_custom_call.1} parent=1 // pred_fallthru
      _
    // Predicated region
    $region10: #{tpu_custom_call.1} parent=1 // pred_check
      _
    $region11: #{tpu_custom_call.1} parent=1 // pred_check_branch
      %30 = sbr.rel (0) target = $region13
    $region12: #{tpu_custom_call.1} parent=1 // pred_region
      %31 = dma.done [#allocation3], 128
    $region13: #{tpu_custom_call.1} parent=1 // pred_fallthru
      _
    // Predicated region
    $region14: #{tpu_custom_call.1} parent=1 // pred_check
      _
    $region15: #{tpu_custom_call.1} parent=1 // pred_check_branch
      %33 = sbr.rel (0) target = $region17
    $region16: #{tpu_custom_call.1} parent=1 // pred_region
      %34 = dma.done [#allocation5], 128
    $region17: #{tpu_custom_call.1} parent=1 // pred_fallthru
      _
    %v35 = vld [vmem:[#allocation2] sm:$0xff]
    %v36 = vld [vmem:[#allocation4] sm:$0xff]
    %v37 = vmul.f32 %v35, %v35
    %vm38 = vcmask 261120
    %v40 = vsel %vm38, %v37, 0
    %42 = vmatprep.subr.mxu0 0.0
    %43 = vmatpush1.msra.mxu0 0.0
    %44 = vmatprep.subr.mxu0 0.0
    %45 = vmatpush1.msra.mxu0 0.0
    %46 = vmatprep.subr.mxu0 0.0
    %47 = vmatpush1.msra.mxu0 0.0
    %48 = vmatprep.subr.mxu0 0.0
    %49 = vmatpush1.msra.mxu0 0.0
    %50 = vmatprep.subr.mxu0 0.0
    %51 = vmatpush1.msra.mxu0 0.0
    %52 = vmatprep.subr.mxu0 0.0
    %53 = vmatpush1.msra.mxu0 0.0
    %54 = vmatprep.subr.mxu0 0.0
    %55 = vmatpush1.msra.mxu0 0.0
    %56 = vmatprep.subr.mxu0 0.0
    %57 = vmatpush1.msra.mxu0 0.0
    %58 = vmatprep.subr.mxu0 0.0
    %59 = vmatpush1.msra.mxu0 0.0
    %60 = vmatprep.subr.mxu0 0.0
    %61 = vmatpush1.msra.mxu0 0.0
    %62 = vmatprep.subr.mxu0 0.0
    %63 = vmatpush1.msra.mxu0 0.0
    %64 = vmatprep.subr.mxu0 0.0
    %65 = vmatpush1.msra.mxu0 0.0
    %66 = vmatprep.subr.mxu0 0.0
    %67 = vmatpush1.msra.mxu0 1.0
    %68 = vmatprep.subr.mxu0 0.0
    %69 = vmatpush1.msra.mxu0 1.0
    %70 = vmatprep.subr.mxu0 0.0
    %71 = vmatpush1.msra.mxu0 1.0
    %72 = vmatprep.subr.mxu0 0.0
    %73 = vmatpush1.msra.mxu0 1.0
    %74 = vmatprep.subr.mxu0 0.0
    %75 = vmatpush2.msra.mxu0 0.0
    %76 = vmatprep.subr.mxu0 0.0
    %77 = vmatpush2.msra.mxu0 0.0
    %78 = vmatprep.subr.mxu0 0.0
    %79 = vmatpush2.msra.mxu0 0.0
    %80 = vmatprep.subr.mxu0 0.0
    %81 = vmatpush2.msra.mxu0 0.0
    %82 = vmatprep.subr.mxu0 0.0
    %83 = vmatpush2.msra.mxu0 0.0
    %84 = vmatprep.subr.mxu0 0.0
    %85 = vmatpush2.msra.mxu0 0.0
    %86 = vmatprep.subr.mxu0 0.0
    %87 = vmatpush2.msra.mxu0 0.0
    %88 = vmatprep.subr.mxu0 0.0
    %89 = vmatpush2.msra.mxu0 0.0
    %90 = vmatprep.subr.mxu0 0.0
    %91 = vmatpush2.msra.mxu0 0.0
    %92 = vmatprep.subr.mxu0 0.0
    %93 = vmatpush2.msra.mxu0 0.0
    %94 = vmatprep.subr.mxu0 0.0
    %95 = vmatpush2.msra.mxu0 0.0
    %96 = vmatprep.subr.mxu0 0.0
    %97 = vmatpush2.msra.mxu0 0.0
    %98 = vmatprep.subr.mxu0 0.0
    %99 = vmatpush2.msra.mxu0 0.0
    %100 = vmatprep.subr.mxu0 0.0
    %101 = vmatpush2.msra.mxu0 0.0
    %102 = vmatprep.subr.mxu0 0.0
    %103 = vmatpush2.msra.mxu0 0.0
    %104 = vmatprep.subr.mxu0 0.0
    %105 = vmatpush2.msra.mxu0 0.0
    %106 = vmatprep.mubr.f32.mxu0 0.0
    %107 = vmatmul.mubr.f32.gmra.mxu0 %v40
    %v108 = vpop.f32.mrf.mxu0
    %v109 = vadd.f32 0.0, %v108
    %v110 = vpop.f32.mrf.mxu0
    %111 = vdwg.mxu0
    %v112 = vmul.f32 %v36, %v36
    %v114 = vsel %vm38, %v112, 0
    %116 = vmatprep.subr.mxu0 0.0
    %117 = vmatpush1.msra.mxu0 0.0
    %118 = vmatprep.subr.mxu0 0.0
    %119 = vmatpush1.msra.mxu0 0.0
    %120 = vmatprep.subr.mxu0 0.0
    %121 = vmatpush1.msra.mxu0 0.0
    %122 = vmatprep.subr.mxu0 0.0
    %123 = vmatpush1.msra.mxu0 0.0
    %124 = vmatprep.subr.mxu0 0.0
    %125 = vmatpush1.msra.mxu0 0.0
    %126 = vmatprep.subr.mxu0 0.0
    %127 = vmatpush1.msra.mxu0 0.0
    %128 = vmatprep.subr.mxu0 0.0
    %129 = vmatpush1.msra.mxu0 0.0
    %130 = vmatprep.subr.mxu0 0.0
    %131 = vmatpush1.msra.mxu0 0.0
    %132 = vmatprep.subr.mxu0 0.0
    %133 = vmatpush1.msra.mxu0 0.0
    %134 = vmatprep.subr.mxu0 0.0
    %135 = vmatpush1.msra.mxu0 0.0
    %136 = vmatprep.subr.mxu0 0.0
    %137 = vmatpush1.msra.mxu0 0.0
    %138 = vmatprep.subr.mxu0 0.0
    %139 = vmatpush1.msra.mxu0 0.0
    %140 = vmatprep.subr.mxu0 0.0
    %141 = vmatpush1.msra.mxu0 1.0
    %142 = vmatprep.subr.mxu0 0.0
    %143 = vmatpush1.msra.mxu0 1.0
    %144 = vmatprep.subr.mxu0 0.0
    %145 = vmatpush1.msra.mxu0 1.0
    %146 = vmatprep.subr.mxu0 0.0
    %147 = vmatpush1.msra.mxu0 1.0
    %148 = vmatprep.subr.mxu0 0.0
    %149 = vmatpush2.msra.mxu0 0.0
    %150 = vmatprep.subr.mxu0 0.0
    %151 = vmatpush2.msra.mxu0 0.0
    %152 = vmatprep.subr.mxu0 0.0
    %153 = vmatpush2.msra.mxu0 0.0
    %154 = vmatprep.subr.mxu0 0.0
    %155 = vmatpush2.msra.mxu0 0.0
    %156 = vmatprep.subr.mxu0 0.0
    %157 = vmatpush2.msra.mxu0 0.0
    %158 = vmatprep.subr.mxu0 0.0
    %159 = vmatpush2.msra.mxu0 0.0
    %160 = vmatprep.subr.mxu0 0.0
    %161 = vmatpush2.msra.mxu0 0.0
    %162 = vmatprep.subr.mxu0 0.0
    %163 = vmatpush2.msra.mxu0 0.0
    %164 = vmatprep.subr.mxu0 0.0
    %165 = vmatpush2.msra.mxu0 0.0
    %166 = vmatprep.subr.mxu0 0.0
    %167 = vmatpush2.msra.mxu0 0.0
    %168 = vmatprep.subr.mxu0 0.0
    %169 = vmatpush2.msra.mxu0 0.0
    %170 = vmatprep.subr.mxu0 0.0
    %171 = vmatpush2.msra.mxu0 0.0
    %172 = vmatprep.subr.mxu0 0.0
    %173 = vmatpush2.msra.mxu0 0.0
    %174 = vmatprep.subr.mxu0 0.0
    %175 = vmatpush2.msra.mxu0 0.0
    %176 = vmatprep.subr.mxu0 0.0
    %177 = vmatpush2.msra.mxu0 0.0
    %178 = vmatprep.subr.mxu0 0.0
    %179 = vmatpush2.msra.mxu0 0.0
    %180 = vmatprep.mubr.f32.mxu0 0.0
    %181 = vmatmul.mubr.f32.gmra.mxu0 %v114
    %v182 = vpop.f32.mrf.mxu0
    %v183 = vadd.f32 0.0, %v182
    %v184 = vpop.f32.mrf.mxu0
    %185 = vdwg.mxu0
    %v186 = vmax.f32 %v109, 1e-24
    %v187 = vrsqrt.pop %v186
    %v188 = vmax.f32 %v183, 1e-24
    %v189 = vrsqrt.pop %v188
    %191 = vset.pattern.permute.xlu0 0
    %192 = vperm.xlu0 %191, %v187
    %v193 = vpop.permute.xlu0 %192
    %v195 = vmul.f32 %v35, %v193
    %197 = vset.pattern.permute.xlu0 0
    %198 = vperm.xlu0 %197, %v189
    %v199 = vpop.permute.xlu0 %198
    %v201 = vmul.f32 %v36, %v199
    %v202 = vsub.f32 %v195, %v201
    %v203 = vmul.f32 %v202, %v202
    %v205 = vsel %vm38, %v203, 0
    %207 = vmatprep.subr.mxu0 0.0
    %208 = vmatpush1.msra.mxu0 0.0
    %209 = vmatprep.subr.mxu0 0.0
    %210 = vmatpush1.msra.mxu0 0.0
    %211 = vmatprep.subr.mxu0 0.0
    %212 = vmatpush1.msra.mxu0 0.0
    %213 = vmatprep.subr.mxu0 0.0
    %214 = vmatpush1.msra.mxu0 0.0
    %215 = vmatprep.subr.mxu0 0.0
    %216 = vmatpush1.msra.mxu0 0.0
    %217 = vmatprep.subr.mxu0 0.0
    %218 = vmatpush1.msra.mxu0 0.0
    %219 = vmatprep.subr.mxu0 0.0
    %220 = vmatpush1.msra.mxu0 0.0
    %221 = vmatprep.subr.mxu0 0.0
    %222 = vmatpush1.msra.mxu0 0.0
    %223 = vmatprep.subr.mxu0 0.0
    %224 = vmatpush1.msra.mxu0 0.0
    %225 = vmatprep.subr.mxu0 0.0
    %226 = vmatpush1.msra.mxu0 0.0
    %227 = vmatprep.subr.mxu0 0.0
    %228 = vmatpush1.msra.mxu0 0.0
    %229 = vmatprep.subr.mxu0 0.0
    %230 = vmatpush1.msra.mxu0 0.0
    %231 = vmatprep.subr.mxu0 0.0
    %232 = vmatpush1.msra.mxu0 1.0
    %233 = vmatprep.subr.mxu0 0.0
    %234 = vmatpush1.msra.mxu0 1.0
    %235 = vmatprep.subr.mxu0 0.0
    %236 = vmatpush1.msra.mxu0 1.0
    %237 = vmatprep.subr.mxu0 0.0
    %238 = vmatpush1.msra.mxu0 1.0
    %239 = vmatprep.subr.mxu0 0.0
    %240 = vmatpush2.msra.mxu0 0.0
    %241 = vmatprep.subr.mxu0 0.0
    %242 = vmatpush2.msra.mxu0 0.0
    %243 = vmatprep.subr.mxu0 0.0
    %244 = vmatpush2.msra.mxu0 0.0
    %245 = vmatprep.subr.mxu0 0.0
    %246 = vmatpush2.msra.mxu0 0.0
    %247 = vmatprep.subr.mxu0 0.0
    %248 = vmatpush2.msra.mxu0 0.0
    %249 = vmatprep.subr.mxu0 0.0
    %250 = vmatpush2.msra.mxu0 0.0
    %251 = vmatprep.subr.mxu0 0.0
    %252 = vmatpush2.msra.mxu0 0.0
    %253 = vmatprep.subr.mxu0 0.0
    %254 = vmatpush2.msra.mxu0 0.0
    %255 = vmatprep.subr.mxu0 0.0
    %256 = vmatpush2.msra.mxu0 0.0
    %257 = vmatprep.subr.mxu0 0.0
    %258 = vmatpush2.msra.mxu0 0.0
    %259 = vmatprep.subr.mxu0 0.0
    %260 = vmatpush2.msra.mxu0 0.0
    %261 = vmatprep.subr.mxu0 0.0
    %262 = vmatpush2.msra.mxu0 0.0
    %263 = vmatprep.subr.mxu0 0.0
    %264 = vmatpush2.msra.mxu0 0.0
    %265 = vmatprep.subr.mxu0 0.0
    %266 = vmatpush2.msra.mxu0 0.0
    %267 = vmatprep.subr.mxu0 0.0
    %268 = vmatpush2.msra.mxu0 0.0
    %269 = vmatprep.subr.mxu0 0.0
    %270 = vmatpush2.msra.mxu0 0.0
    %271 = vmatprep.mubr.f32.mxu0 0.0
    %272 = vmatmul.mubr.f32.gmra.mxu0 %v205
    %v273 = vpop.f32.mrf.mxu0
    %v274 = vadd.f32 0.0, %v273
    %v275 = vpop.f32.mrf.mxu0
    %276 = vdwg.mxu0
    %vm277 = vcmask 7168
    %278 = vst.msk [vmem:[%s2] sm:$0xff] %vm277, %v274
    // Predicated region
    $region18: #{tpu_custom_call.1} parent=1 // pred_check
      _
    $region19: #{tpu_custom_call.1} parent=1 // pred_check_branch
      %280 = sbr.rel (0) target = $region21
    $region20: #{tpu_custom_call.1} parent=1 // pred_region
      _
    $region21: #{tpu_custom_call.1} parent=1 // pred_fallthru
      _
    // Predicated region
    $region22: #{tpu_custom_call.1} parent=1 // pred_check
      _
    $region23: #{tpu_custom_call.1} parent=1 // pred_check_branch
      %282 = sbr.rel (0) target = $region25
    $region24: #{tpu_custom_call.1} parent=1 // pred_region
      _
    $region25: #{tpu_custom_call.1} parent=1 // pred_fallthru
      _
    %283 = vsyncpa [#allocation3], 1
    %284 = vsyncpa [#allocation5], 1

</llo_original>
